<compile_context>
chip_gen: v5e
topology: v5e:2x2
jax: 0.10.0
libtpu: 0.0.40
codegen_flags: <defaults>
</compile_context>

<pallas_src>
import jax
import jax.numpy as jnp
import numpy as np
from jax.experimental import pallas as pl
from jax.experimental.pallas import tpu as pltpu

N_KERNELS = 15
C_PAD = 16          # channel axis padded 15 -> 16 (sublane aligned); pad channel is all-zero
N_CLASSES = 10
BN_EPS = 1e-5
N_POS = 25          # 5x5 conv output positions on the 9x9 pooled image
N_PIX = 81          # flattened 9x9 pooled image

# MaxPool2d(2) windows on the flattened 5x5 conv-output grid (p = oi*5 + oj); the 5th
# row/col is dropped by floor-mode pooling.  Window order is pp = pi*2 + pj.
_POOL_WINDOWS = (
    (0, 1, 5, 6),
    (2, 3, 7, 8),
    (10, 11, 15, 16),
    (12, 13, 17, 18),
)

# _IDX[p, k] = flattened 9x9 pixel read by conv tap k = di*5+dj at output position
# p = oi*5+oj (used to fold im2col into the conv weight on the wrapper side).
_IDX = np.array(
    [[(oi + di) * 9 + (oj + dj) for di in range(5) for dj in range(5)]
     for oi in range(5) for oj in range(5)], dtype=np.int32)            # (25, 25)


def _round_up(a, b):
    return (a + b - 1) // b * b


def _stats_kernel(xd_ref, w_ref, stat_ref):
    """Pass 1: accumulate per-channel sum / sum-of-squares of the conv output."""
    @pl.when(pl.program_id(0) == 0)
    def _():
        stat_ref[...] = jnp.zeros_like(stat_ref)

    x = xd_ref[...]                                              # (81, TB), batch on lanes
    acc_s = jnp.zeros((C_PAD, x.shape[1]), jnp.float32)
    acc_q = jnp.zeros((C_PAD, x.shape[1]), jnp.float32)
    for p in range(N_POS):                                       # all 25 positions feed BN stats
        hp = jnp.dot(w_ref[p], x, preferred_element_type=jnp.float32)   # (16, TB)
        acc_s = acc_s + hp
        acc_q = acc_q + hp * hp
    stat_ref[...] = stat_ref[...] + jnp.concatenate(
        [jnp.sum(acc_s, axis=1, keepdims=True),
         jnp.sum(acc_q, axis=1, keepdims=True)], axis=1)         # (16, 2)


def _apply_kernel(xd_ref, w_ref, scale_ref, shift_ref, wf_ref, bf_ref, out_ref):
    """Pass 2: conv + folded BN + ReLU + MaxPool2d(2) + fc2 + LogSoftmax."""
    x = xd_ref[...]                                              # (81, TB)
    scale = scale_ref[...]                                       # (16, 1)
    shift = shift_ref[...]                                       # (16, 1)

    feats = []
    for window in _POOL_WINDOWS:                                 # only the 16 pooled positions
        m = None
        for p in window:
            hp = jnp.dot(w_ref[p], x, preferred_element_type=jnp.float32)  # (16, TB)
            hp = hp * scale + shift                              # folded BatchNorm
            m = hp if m is None else jnp.maximum(m, hp)
        feats.append(jnp.maximum(m, 0.0))                        # ReLU(max) == max(ReLU)
    f = jnp.concatenate(feats, axis=0)                           # (64, TB), row = pp*16 + c

    logits = jnp.dot(wf_ref[...], f,
                     preferred_element_type=jnp.float32) + bf_ref[...]   # (10, TB)

    # LogSoftmax over classes (sublane axis)
    zmax = jnp.max(logits, axis=0, keepdims=True)
    z = logits - zmax
    lse = jnp.log(jnp.sum(jnp.exp(z), axis=0, keepdims=True))
    out_ref[...] = z - lse


def tinynet2_forward(x, params, *, batch_tile=1024):
    n = x.shape[0]

    # --- wrapper glue (XLA): AvgPool2d(3,3) 28x28 -> 9x9, flatten, batch -> lanes ---
    xd = x[:, 0, :27, :27].reshape(n, 9, 3, 9, 3).mean(axis=(2, 4))      # (N, 9, 9)
    xd_t = xd.reshape(n, N_PIX).T                                        # (81, N)

    tb = min(_round_up(batch_tile, 128), _round_up(n, 128))
    npad = _round_up(n, tb)
    num_tiles = npad // tb
    # Zero lane-padding is exact: with no conv bias in-kernel, padded samples give
    # conv output 0 and contribute 0 to both BN sums (which are divided by true N*25).
    xd_t = jnp.pad(xd_t, ((0, 0), (0, npad - n)))                        # (81, Npad)

    # --- weight re-layout (tiny, done once per call in XLA) ---
    # Fold im2col into the conv weight: W[p, c, r] = conv_w[c, di, dj] for the pixel
    # r = (oi+di)*9 + (oj+dj) read by tap (di, dj) at output position p = oi*5 + oj.
    w2 = params['conv_w'].reshape(N_KERNELS, N_POS)                      # (15, 25)
    sel = jax.nn.one_hot(_IDX, N_PIX, dtype=jnp.float32)                 # (25, 25, 81)
    w_pos = jnp.einsum('ck,pkr->pcr', w2, sel)                           # (25, 15, 81)
    w_pos = jnp.pad(w_pos, ((0, 0), (0, C_PAD - N_KERNELS), (0, 0)))     # (25, 16, 81)
    # NOTE: conv bias is intentionally NOT applied in the kernels — a per-channel bias
    # followed by training-mode BatchNorm cancels exactly in (h - mean).

    gamma = jnp.pad(params['bn_g'], (0, C_PAD - N_KERNELS)).reshape(C_PAD, 1)
    beta = jnp.pad(params['bn_b'], (0, C_PAD - N_KERNELS)).reshape(C_PAD, 1)

    # fc2.weight columns are PyTorch flatten order c*4 + pp; our features are pp*16 + c.
    wf = params['fc_w'].reshape(N_CLASSES, N_KERNELS, 4)                 # [j, c, pp]
    wf = jnp.transpose(wf, (0, 2, 1))                                    # [j, pp, c]
    wf = jnp.pad(wf, ((0, 0), (0, 0), (0, C_PAD - N_KERNELS)))           # [j, pp, c16]
    wf = wf.reshape(N_CLASSES, 4 * C_PAD)                                # (10, 64)
    bf = params['fc_b'].reshape(N_CLASSES, 1)                            # (10, 1)

    vmem_bytes = 32 * 1024 * 1024   # explicit; tiles sized far below v7x's 64 MiB VMEM

    # --- pass 1: full-batch BN statistics, accumulated across batch tiles ---
    stats = pl.pallas_call(
        _stats_kernel,
        out_shape=jax.ShapeDtypeStruct((C_PAD, 2), jnp.float32),
        grid=(num_tiles,),
        in_specs=[
            pl.BlockSpec((N_PIX, tb), lambda t: (0, t)),
            pl.BlockSpec((N_POS, C_PAD, N_PIX), lambda t: (0, 0, 0)),
        ],
        out_specs=pl.BlockSpec((C_PAD, 2), lambda t: (0, 0)),
        compiler_params=pltpu.CompilerParams(
            dimension_semantics=("arbitrary",), vmem_limit_bytes=vmem_bytes),
    )(xd_t, w_pos)

    # Fold batch stats + (gamma, beta) into a single per-channel scale/shift.
    count = float(n * N_POS)                      # true count (zero-padding adds 0 to sums)
    mean = stats[:, 0:1] / count
    var = stats[:, 1:2] / count - mean * mean
    scale = gamma * jax.lax.rsqrt(var + BN_EPS)
    shift = beta - mean * scale

    # --- pass 2: BN + ReLU + MaxPool + fc2 + LogSoftmax, batch tiles in parallel ---
    out_t = pl.pallas_call(
        _apply_kernel,
        out_shape=jax.ShapeDtypeStruct((N_CLASSES, npad), jnp.float32),
        grid=(num_tiles,),
        in_specs=[
            pl.BlockSpec((N_PIX, tb), lambda t: (0, t)),
            pl.BlockSpec((N_POS, C_PAD, N_PIX), lambda t: (0, 0, 0)),
            pl.BlockSpec((C_PAD, 1), lambda t: (0, 0)),
            pl.BlockSpec((C_PAD, 1), lambda t: (0, 0)),
            pl.BlockSpec((N_CLASSES, 4 * C_PAD), lambda t: (0, 0)),
            pl.BlockSpec((N_CLASSES, 1), lambda t: (0, 0)),
        ],
        out_specs=pl.BlockSpec((N_CLASSES, tb), lambda t: (0, t)),
        compiler_params=pltpu.CompilerParams(
            dimension_semantics=("parallel",), vmem_limit_bytes=vmem_bytes),
    )(xd_t, w_pos, scale, shift, wf, bf)

    return out_t[:, :n].T                                                # (N, 10)


def init_params(key):
    k1, k2, k3, k4 = jax.random.split(key, 4)
    return {
        'conv_w': 0.1 * jax.random.normal(k1, (N_KERNELS, 1, 5, 5), jnp.float32),
        'conv_b': 0.1 * jax.random.normal(k2, (N_KERNELS,), jnp.float32),
        'bn_g': jnp.ones((N_KERNELS,), jnp.float32),    # PyTorch BatchNorm default init
        'bn_b': jnp.zeros((N_KERNELS,), jnp.float32),
        'fc_w': 0.1 * jax.random.normal(k3, (N_CLASSES, 60), jnp.float32),
        'fc_b': 0.1 * jax.random.normal(k4, (N_CLASSES,), jnp.float32),
    }


def reference_forward(x, params):
    """Pure-JAX reference with identical semantics (keeps the conv bias)."""
    n = x.shape[0]
    xd = x[:, 0, :27, :27].reshape(n, 9, 3, 9, 3).mean(axis=(2, 4))
    conv = jax.lax.conv_general_dilated(
        xd[:, None, :, :], params['conv_w'], (1, 1), 'VALID',
        dimension_numbers=('NCHW', 'OIHW', 'NCHW'))
    conv = conv + params['conv_b'][None, :, None, None]                  # (N, 15, 5, 5)
    mean = conv.mean(axis=(0, 2, 3), keepdims=True)
    var = ((conv - mean) ** 2).mean(axis=(0, 2, 3), keepdims=True)
    h = (params['bn_g'][None, :, None, None] * (conv - mean)
         / jnp.sqrt(var + BN_EPS) + params['bn_b'][None, :, None, None])
    h = jnp.maximum(h, 0.0)
    hp = h[:, :, :4, :4].reshape(n, N_KERNELS, 2, 2, 2, 2).max(axis=(3, 5))
    f = hp.reshape(n, N_KERNELS * 4)
    logits = f @ params['fc_w'].T + params['fc_b']
    return jax.nn.log_softmax(logits, axis=1)


if __name__ == "__main__":
    key = jax.random.PRNGKey(0)
    kx, kp = jax.random.split(key)
    params = init_params(kp)

    # Input size implied by the module: fc2 expects 60 = 15ch * 2 * 2, which (with
    # downscale) corresponds to a 28x28 single-channel image (MNIST-like).
    x = jax.random.normal(kx, (2, 1, 28, 28), jnp.float32)
    out = jax.block_until_ready(tinynet2_forward(x, params))
    ref = jax.block_until_ready(reference_forward(x, params))
    assert out.shape == (2, N_CLASSES)
    assert bool(jnp.allclose(out, ref, rtol=1e-4, atol=1e-4)), (out, ref)

    # Exercise the multi-tile / padded-batch path (grid > 1, N not a tile multiple).
    x2 = jax.random.normal(jax.random.PRNGKey(1), (300, 1, 28, 28), jnp.float32)
    out2 = jax.block_until_ready(tinynet2_forward(x2, params, batch_tile=128))
    ref2 = jax.block_until_ready(reference_forward(x2, params))
    assert out2.shape == (300, N_CLASSES)
    assert bool(jnp.allclose(out2, ref2, rtol=1e-4, atol=1e-4))

    print("KERNEL_OK")
</pallas_src>

<mosaic_0001>
module attributes {stable_mosaic.version = 11 : i64} {
  func.func @_stats_kernel(%arg0: i32, %arg1: memref<81x128xf32, #tpu.memory_space<vmem>>, %arg2: memref<25x16x81xf32, #tpu.memory_space<vmem>>, %arg3: memref<16x2xf32, #tpu.memory_space<vmem>>) attributes {dimension_semantics = [#tpu.dimension_semantics<arbitrary>], iteration_bounds = array<i64: 1>, scalar_prefetch = 0 : i64, scratch_operands = 0 : i64, tpu.core_type = #tpu.core_type<tc>, window_params = [{transform_indices = @transform_0, window_bounds = array<i64: 81, 128>}, {pipeline_mode = #tpu.pipeline_mode<synchronous>, transform_indices = @transform_1, window_bounds = array<i64: 25, 16, 81>}, {pipeline_mode = #tpu.pipeline_mode<synchronous>, transform_indices = @transform_2, window_bounds = array<i64: 16, 2>}]} {
    %c0_i32 = arith.constant 0 : i32
    %0 = arith.cmpi eq, %arg0, %c0_i32 : i32
    %1 = arith.extui %0 : i1 to i32
    %c0_i32_0 = arith.constant 0 : i32
    %2 = arith.cmpi ne, %1, %c0_i32_0 : i32
    scf.if %2 {
      %cst_85 = arith.constant 0.000000e+00 : f32
      %164 = vector.broadcast %cst_85 : f32 to vector<16x2xf32>
      %c0_86 = arith.constant 0 : index
      %c0_87 = arith.constant 0 : index
      %165 = vector.load %arg3[%c0_86, %c0_87] : memref<16x2xf32, #tpu.memory_space<vmem>>, vector<16x2xf32>
      tpu.vector_store %arg3[%c0_86, %c0_87], %164 {strides = array<i32>} : memref<16x2xf32, #tpu.memory_space<vmem>>, vector<16x2xf32>,
    } else {
    }
    %c0 = arith.constant 0 : index
    %c0_1 = arith.constant 0 : index
    %3 = vector.load %arg1[%c0, %c0_1] : memref<81x128xf32, #tpu.memory_space<vmem>>, vector<81x128xf32>
    %cst = arith.constant 0.000000e+00 : f32
    %4 = vector.broadcast %cst : f32 to vector<16x128xf32>
    %cst_2 = arith.constant 0.000000e+00 : f32
    %5 = vector.broadcast %cst_2 : f32 to vector<16x128xf32>
    %c0_3 = arith.constant 0 : index
    %c0_4 = arith.constant 0 : index
    %c0_5 = arith.constant 0 : index
    %6 = vector.load %arg2[%c0_3, %c0_4, %c0_5] : memref<25x16x81xf32, #tpu.memory_space<vmem>>, vector<1x16x81xf32>
    %7 = vector.shape_cast %6 : vector<1x16x81xf32> to vector<16x81xf32>
    %cst_6 = arith.constant dense<0.000000e+00> : vector<16x128xf32>
    %8 = tpu.matmul %7, %3, %cst_6 {dimension_numbers = #tpu.dot_dimension_numbers<[1], [0], [0], [1], [0, 0, 1, 1], [], []>} : vector<16x81xf32>, vector<81x128xf32>, vector<16x128xf32> -> vector<16x128xf32>
    %9 = arith.addf %4, %8 : vector<16x128xf32>
    %10 = arith.mulf %8, %8 : vector<16x128xf32>
    %11 = arith.addf %5, %10 : vector<16x128xf32>
    %c1 = arith.constant 1 : index
    %c0_7 = arith.constant 0 : index
    %c0_8 = arith.constant 0 : index
    %12 = vector.load %arg2[%c1, %c0_7, %c0_8] : memref<25x16x81xf32, #tpu.memory_space<vmem>>, vector<1x16x81xf32>
    %13 = vector.shape_cast %12 : vector<1x16x81xf32> to vector<16x81xf32>
    %cst_9 = arith.constant dense<0.000000e+00> : vector<16x128xf32>
    %14 = tpu.matmul %13, %3, %cst_9 {dimension_numbers = #tpu.dot_dimension_numbers<[1], [0], [0], [1], [0, 0, 1, 1], [], []>} : vector<16x81xf32>, vector<81x128xf32>, vector<16x128xf32> -> vector<16x128xf32>
    %15 = arith.addf %9, %14 : vector<16x128xf32>
    %16 = arith.mulf %14, %14 : vector<16x128xf32>
    %17 = arith.addf %11, %16 : vector<16x128xf32>
    %c2 = arith.constant 2 : index
    %c0_10 = arith.constant 0 : index
    %c0_11 = arith.constant 0 : index
    %18 = vector.load %arg2[%c2, %c0_10, %c0_11] : memref<25x16x81xf32, #tpu.memory_space<vmem>>, vector<1x16x81xf32>
    %19 = vector.shape_cast %18 : vector<1x16x81xf32> to vector<16x81xf32>
    %cst_12 = arith.constant dense<0.000000e+00> : vector<16x128xf32>
    %20 = tpu.matmul %19, %3, %cst_12 {dimension_numbers = #tpu.dot_dimension_numbers<[1], [0], [0], [1], [0, 0, 1, 1], [], []>} : vector<16x81xf32>, vector<81x128xf32>, vector<16x128xf32> -> vector<16x128xf32>
    %21 = arith.addf %15, %20 : vector<16x128xf32>
    %22 = arith.mulf %20, %20 : vector<16x128xf32>
    %23 = arith.addf %17, %22 : vector<16x128xf32>
    %c3 = arith.constant 3 : index
    %c0_13 = arith.constant 0 : index
    %c0_14 = arith.constant 0 : index
    %24 = vector.load %arg2[%c3, %c0_13, %c0_14] : memref<25x16x81xf32, #tpu.memory_space<vmem>>, vector<1x16x81xf32>
    %25 = vector.shape_cast %24 : vector<1x16x81xf32> to vector<16x81xf32>
    %cst_15 = arith.constant dense<0.000000e+00> : vector<16x128xf32>
    %26 = tpu.matmul %25, %3, %cst_15 {dimension_numbers = #tpu.dot_dimension_numbers<[1], [0], [0], [1], [0, 0, 1, 1], [], []>} : vector<16x81xf32>, vector<81x128xf32>, vector<16x128xf32> -> vector<16x128xf32>
    %27 = arith.addf %21, %26 : vector<16x128xf32>
    %28 = arith.mulf %26, %26 : vector<16x128xf32>
    %29 = arith.addf %23, %28 : vector<16x128xf32>
    %c4 = arith.constant 4 : index
    %c0_16 = arith.constant 0 : index
    %c0_17 = arith.constant 0 : index
    %30 = vector.load %arg2[%c4, %c0_16, %c0_17] : memref<25x16x81xf32, #tpu.memory_space<vmem>>, vector<1x16x81xf32>
    %31 = vector.shape_cast %30 : vector<1x16x81xf32> to vector<16x81xf32>
    %cst_18 = arith.constant dense<0.000000e+00> : vector<16x128xf32>
    %32 = tpu.matmul %31, %3, %cst_18 {dimension_numbers = #tpu.dot_dimension_numbers<[1], [0], [0], [1], [0, 0, 1, 1], [], []>} : vector<16x81xf32>, vector<81x128xf32>, vector<16x128xf32> -> vector<16x128xf32>
    %33 = arith.addf %27, %32 : vector<16x128xf32>
    %34 = arith.mulf %32, %32 : vector<16x128xf32>
    %35 = arith.addf %29, %34 : vector<16x128xf32>
    %c5 = arith.constant 5 : index
    %c0_19 = arith.constant 0 : index
    %c0_20 = arith.constant 0 : index
    %36 = vector.load %arg2[%c5, %c0_19, %c0_20] : memref<25x16x81xf32, #tpu.memory_space<vmem>>, vector<1x16x81xf32>
    %37 = vector.shape_cast %36 : vector<1x16x81xf32> to vector<16x81xf32>
    %cst_21 = arith.constant dense<0.000000e+00> : vector<16x128xf32>
    %38 = tpu.matmul %37, %3, %cst_21 {dimension_numbers = #tpu.dot_dimension_numbers<[1], [0], [0], [1], [0, 0, 1, 1], [], []>} : vector<16x81xf32>, vector<81x128xf32>, vector<16x128xf32> -> vector<16x128xf32>
    %39 = arith.addf %33, %38 : vector<16x128xf32>
    %40 = arith.mulf %38, %38 : vector<16x128xf32>
    %41 = arith.addf %35, %40 : vector<16x128xf32>
    %c6 = arith.constant 6 : index
    %c0_22 = arith.constant 0 : index
    %c0_23 = arith.constant 0 : index
    %42 = vector.load %arg2[%c6, %c0_22, %c0_23] : memref<25x16x81xf32, #tpu.memory_space<vmem>>, vector<1x16x81xf32>
    %43 = vector.shape_cast %42 : vector<1x16x81xf32> to vector<16x81xf32>
    %cst_24 = arith.constant dense<0.000000e+00> : vector<16x128xf32>
    %44 = tpu.matmul %43, %3, %cst_24 {dimension_numbers = #tpu.dot_dimension_numbers<[1], [0], [0], [1], [0, 0, 1, 1], [], []>} : vector<16x81xf32>, vector<81x128xf32>, vector<16x128xf32> -> vector<16x128xf32>
    %45 = arith.addf %39, %44 : vector<16x128xf32>
    %46 = arith.mulf %44, %44 : vector<16x128xf32>
    %47 = arith.addf %41, %46 : vector<16x128xf32>
    %c7 = arith.constant 7 : index
    %c0_25 = arith.constant 0 : index
    %c0_26 = arith.constant 0 : index
    %48 = vector.load %arg2[%c7, %c0_25, %c0_26] : memref<25x16x81xf32, #tpu.memory_space<vmem>>, vector<1x16x81xf32>
    %49 = vector.shape_cast %48 : vector<1x16x81xf32> to vector<16x81xf32>
    %cst_27 = arith.constant dense<0.000000e+00> : vector<16x128xf32>
    %50 = tpu.matmul %49, %3, %cst_27 {dimension_numbers = #tpu.dot_dimension_numbers<[1], [0], [0], [1], [0, 0, 1, 1], [], []>} : vector<16x81xf32>, vector<81x128xf32>, vector<16x128xf32> -> vector<16x128xf32>
    %51 = arith.addf %45, %50 : vector<16x128xf32>
    %52 = arith.mulf %50, %50 : vector<16x128xf32>
    %53 = arith.addf %47, %52 : vector<16x128xf32>
    %c8 = arith.constant 8 : index
    %c0_28 = arith.constant 0 : index
    %c0_29 = arith.constant 0 : index
    %54 = vector.load %arg2[%c8, %c0_28, %c0_29] : memref<25x16x81xf32, #tpu.memory_space<vmem>>, vector<1x16x81xf32>
    %55 = vector.shape_cast %54 : vector<1x16x81xf32> to vector<16x81xf32>
    %cst_30 = arith.constant dense<0.000000e+00> : vector<16x128xf32>
    %56 = tpu.matmul %55, %3, %cst_30 {dimension_numbers = #tpu.dot_dimension_numbers<[1], [0], [0], [1], [0, 0, 1, 1], [], []>} : vector<16x81xf32>, vector<81x128xf32>, vector<16x128xf32> -> vector<16x128xf32>
    %57 = arith.addf %51, %56 : vector<16x128xf32>
    %58 = arith.mulf %56, %56 : vector<16x128xf32>
    %59 = arith.addf %53, %58 : vector<16x128xf32>
    %c9 = arith.constant 9 : index
    %c0_31 = arith.constant 0 : index
    %c0_32 = arith.constant 0 : index
    %60 = vector.load %arg2[%c9, %c0_31, %c0_32] : memref<25x16x81xf32, #tpu.memory_space<vmem>>, vector<1x16x81xf32>
    %61 = vector.shape_cast %60 : vector<1x16x81xf32> to vector<16x81xf32>
    %cst_33 = arith.constant dense<0.000000e+00> : vector<16x128xf32>
    %62 = tpu.matmul %61, %3, %cst_33 {dimension_numbers = #tpu.dot_dimension_numbers<[1], [0], [0], [1], [0, 0, 1, 1], [], []>} : vector<16x81xf32>, vector<81x128xf32>, vector<16x128xf32> -> vector<16x128xf32>
    %63 = arith.addf %57, %62 : vector<16x128xf32>
    %64 = arith.mulf %62, %62 : vector<16x128xf32>
    %65 = arith.addf %59, %64 : vector<16x128xf32>
    %c10 = arith.constant 10 : index
    %c0_34 = arith.constant 0 : index
    %c0_35 = arith.constant 0 : index
    %66 = vector.load %arg2[%c10, %c0_34, %c0_35] : memref<25x16x81xf32, #tpu.memory_space<vmem>>, vector<1x16x81xf32>
    %67 = vector.shape_cast %66 : vector<1x16x81xf32> to vector<16x81xf32>
    %cst_36 = arith.constant dense<0.000000e+00> : vector<16x128xf32>
    %68 = tpu.matmul %67, %3, %cst_36 {dimension_numbers = #tpu.dot_dimension_numbers<[1], [0], [0], [1], [0, 0, 1, 1], [], []>} : vector<16x81xf32>, vector<81x128xf32>, vector<16x128xf32> -> vector<16x128xf32>
    %69 = arith.addf %63, %68 : vector<16x128xf32>
    %70 = arith.mulf %68, %68 : vector<16x128xf32>
    %71 = arith.addf %65, %70 : vector<16x128xf32>
    %c11 = arith.constant 11 : index
    %c0_37 = arith.constant 0 : index
    %c0_38 = arith.constant 0 : index
    %72 = vector.load %arg2[%c11, %c0_37, %c0_38] : memref<25x16x81xf32, #tpu.memory_space<vmem>>, vector<1x16x81xf32>
    %73 = vector.shape_cast %72 : vector<1x16x81xf32> to vector<16x81xf32>
    %cst_39 = arith.constant dense<0.000000e+00> : vector<16x128xf32>
    %74 = tpu.matmul %73, %3, %cst_39 {dimension_numbers = #tpu.dot_dimension_numbers<[1], [0], [0], [1], [0, 0, 1, 1], [], []>} : vector<16x81xf32>, vector<81x128xf32>, vector<16x128xf32> -> vector<16x128xf32>
    %75 = arith.addf %69, %74 : vector<16x128xf32>
    %76 = arith.mulf %74, %74 : vector<16x128xf32>
    %77 = arith.addf %71, %76 : vector<16x128xf32>
    %c12 = arith.constant 12 : index
    %c0_40 = arith.constant 0 : index
    %c0_41 = arith.constant 0 : index
    %78 = vector.load %arg2[%c12, %c0_40, %c0_41] : memref<25x16x81xf32, #tpu.memory_space<vmem>>, vector<1x16x81xf32>
    %79 = vector.shape_cast %78 : vector<1x16x81xf32> to vector<16x81xf32>
    %cst_42 = arith.constant dense<0.000000e+00> : vector<16x128xf32>
    %80 = tpu.matmul %79, %3, %cst_42 {dimension_numbers = #tpu.dot_dimension_numbers<[1], [0], [0], [1], [0, 0, 1, 1], [], []>} : vector<16x81xf32>, vector<81x128xf32>, vector<16x128xf32> -> vector<16x128xf32>
    %81 = arith.addf %75, %80 : vector<16x128xf32>
    %82 = arith.mulf %80, %80 : vector<16x128xf32>
    %83 = arith.addf %77, %82 : vector<16x128xf32>
    %c13 = arith.constant 13 : index
    %c0_43 = arith.constant 0 : index
    %c0_44 = arith.constant 0 : index
    %84 = vector.load %arg2[%c13, %c0_43, %c0_44] : memref<25x16x81xf32, #tpu.memory_space<vmem>>, vector<1x16x81xf32>
    %85 = vector.shape_cast %84 : vector<1x16x81xf32> to vector<16x81xf32>
    %cst_45 = arith.constant dense<0.000000e+00> : vector<16x128xf32>
    %86 = tpu.matmul %85, %3, %cst_45 {dimension_numbers = #tpu.dot_dimension_numbers<[1], [0], [0], [1], [0, 0, 1, 1], [], []>} : vector<16x81xf32>, vector<81x128xf32>, vector<16x128xf32> -> vector<16x128xf32>
    %87 = arith.addf %81, %86 : vector<16x128xf32>
    %88 = arith.mulf %86, %86 : vector<16x128xf32>
    %89 = arith.addf %83, %88 : vector<16x128xf32>
    %c14 = arith.constant 14 : index
    %c0_46 = arith.constant 0 : index
    %c0_47 = arith.constant 0 : index
    %90 = vector.load %arg2[%c14, %c0_46, %c0_47] : memref<25x16x81xf32, #tpu.memory_space<vmem>>, vector<1x16x81xf32>
    %91 = vector.shape_cast %90 : vector<1x16x81xf32> to vector<16x81xf32>
    %cst_48 = arith.constant dense<0.000000e+00> : vector<16x128xf32>
    %92 = tpu.matmul %91, %3, %cst_48 {dimension_numbers = #tpu.dot_dimension_numbers<[1], [0], [0], [1], [0, 0, 1, 1], [], []>} : vector<16x81xf32>, vector<81x128xf32>, vector<16x128xf32> -> vector<16x128xf32>
    %93 = arith.addf %87, %92 : vector<16x128xf32>
    %94 = arith.mulf %92, %92 : vector<16x128xf32>
    %95 = arith.addf %89, %94 : vector<16x128xf32>
    %c15 = arith.constant 15 : index
    %c0_49 = arith.constant 0 : index
    %c0_50 = arith.constant 0 : index
    %96 = vector.load %arg2[%c15, %c0_49, %c0_50] : memref<25x16x81xf32, #tpu.memory_space<vmem>>, vector<1x16x81xf32>
    %97 = vector.shape_cast %96 : vector<1x16x81xf32> to vector<16x81xf32>
    %cst_51 = arith.constant dense<0.000000e+00> : vector<16x128xf32>
    %98 = tpu.matmul %97, %3, %cst_51 {dimension_numbers = #tpu.dot_dimension_numbers<[1], [0], [0], [1], [0, 0, 1, 1], [], []>} : vector<16x81xf32>, vector<81x128xf32>, vector<16x128xf32> -> vector<16x128xf32>
    %99 = arith.addf %93, %98 : vector<16x128xf32>
    %100 = arith.mulf %98, %98 : vector<16x128xf32>
    %101 = arith.addf %95, %100 : vector<16x128xf32>
    %c16 = arith.constant 16 : index
    %c0_52 = arith.constant 0 : index
    %c0_53 = arith.constant 0 : index
    %102 = vector.load %arg2[%c16, %c0_52, %c0_53] : memref<25x16x81xf32, #tpu.memory_space<vmem>>, vector<1x16x81xf32>
    %103 = vector.shape_cast %102 : vector<1x16x81xf32> to vector<16x81xf32>
    %cst_54 = arith.constant dense<0.000000e+00> : vector<16x128xf32>
    %104 = tpu.matmul %103, %3, %cst_54 {dimension_numbers = #tpu.dot_dimension_numbers<[1], [0], [0], [1], [0, 0, 1, 1], [], []>} : vector<16x81xf32>, vector<81x128xf32>, vector<16x128xf32> -> vector<16x128xf32>
    %105 = arith.addf %99, %104 : vector<16x128xf32>
    %106 = arith.mulf %104, %104 : vector<16x128xf32>
    %107 = arith.addf %101, %106 : vector<16x128xf32>
    %c17 = arith.constant 17 : index
    %c0_55 = arith.constant 0 : index
    %c0_56 = arith.constant 0 : index
    %108 = vector.load %arg2[%c17, %c0_55, %c0_56] : memref<25x16x81xf32, #tpu.memory_space<vmem>>, vector<1x16x81xf32>
    %109 = vector.shape_cast %108 : vector<1x16x81xf32> to vector<16x81xf32>
    %cst_57 = arith.constant dense<0.000000e+00> : vector<16x128xf32>
    %110 = tpu.matmul %109, %3, %cst_57 {dimension_numbers = #tpu.dot_dimension_numbers<[1], [0], [0], [1], [0, 0, 1, 1], [], []>} : vector<16x81xf32>, vector<81x128xf32>, vector<16x128xf32> -> vector<16x128xf32>
    %111 = arith.addf %105, %110 : vector<16x128xf32>
    %112 = arith.mulf %110, %110 : vector<16x128xf32>
    %113 = arith.addf %107, %112 : vector<16x128xf32>
    %c18 = arith.constant 18 : index
    %c0_58 = arith.constant 0 : index
    %c0_59 = arith.constant 0 : index
    %114 = vector.load %arg2[%c18, %c0_58, %c0_59] : memref<25x16x81xf32, #tpu.memory_space<vmem>>, vector<1x16x81xf32>
    %115 = vector.shape_cast %114 : vector<1x16x81xf32> to vector<16x81xf32>
    %cst_60 = arith.constant dense<0.000000e+00> : vector<16x128xf32>
    %116 = tpu.matmul %115, %3, %cst_60 {dimension_numbers = #tpu.dot_dimension_numbers<[1], [0], [0], [1], [0, 0, 1, 1], [], []>} : vector<16x81xf32>, vector<81x128xf32>, vector<16x128xf32> -> vector<16x128xf32>
    %117 = arith.addf %111, %116 : vector<16x128xf32>
    %118 = arith.mulf %116, %116 : vector<16x128xf32>
    %119 = arith.addf %113, %118 : vector<16x128xf32>
    %c19 = arith.constant 19 : index
    %c0_61 = arith.constant 0 : index
    %c0_62 = arith.constant 0 : index
    %120 = vector.load %arg2[%c19, %c0_61, %c0_62] : memref<25x16x81xf32, #tpu.memory_space<vmem>>, vector<1x16x81xf32>
    %121 = vector.shape_cast %120 : vector<1x16x81xf32> to vector<16x81xf32>
    %cst_63 = arith.constant dense<0.000000e+00> : vector<16x128xf32>
    %122 = tpu.matmul %121, %3, %cst_63 {dimension_numbers = #tpu.dot_dimension_numbers<[1], [0], [0], [1], [0, 0, 1, 1], [], []>} : vector<16x81xf32>, vector<81x128xf32>, vector<16x128xf32> -> vector<16x128xf32>
    %123 = arith.addf %117, %122 : vector<16x128xf32>
    %124 = arith.mulf %122, %122 : vector<16x128xf32>
    %125 = arith.addf %119, %124 : vector<16x128xf32>
    %c20 = arith.constant 20 : index
    %c0_64 = arith.constant 0 : index
    %c0_65 = arith.constant 0 : index
    %126 = vector.load %arg2[%c20, %c0_64, %c0_65] : memref<25x16x81xf32, #tpu.memory_space<vmem>>, vector<1x16x81xf32>
    %127 = vector.shape_cast %126 : vector<1x16x81xf32> to vector<16x81xf32>
    %cst_66 = arith.constant dense<0.000000e+00> : vector<16x128xf32>
    %128 = tpu.matmul %127, %3, %cst_66 {dimension_numbers = #tpu.dot_dimension_numbers<[1], [0], [0], [1], [0, 0, 1, 1], [], []>} : vector<16x81xf32>, vector<81x128xf32>, vector<16x128xf32> -> vector<16x128xf32>
    %129 = arith.addf %123, %128 : vector<16x128xf32>
    %130 = arith.mulf %128, %128 : vector<16x128xf32>
    %131 = arith.addf %125, %130 : vector<16x128xf32>
    %c21 = arith.constant 21 : index
    %c0_67 = arith.constant 0 : index
    %c0_68 = arith.constant 0 : index
    %132 = vector.load %arg2[%c21, %c0_67, %c0_68] : memref<25x16x81xf32, #tpu.memory_space<vmem>>, vector<1x16x81xf32>
    %133 = vector.shape_cast %132 : vector<1x16x81xf32> to vector<16x81xf32>
    %cst_69 = arith.constant dense<0.000000e+00> : vector<16x128xf32>
    %134 = tpu.matmul %133, %3, %cst_69 {dimension_numbers = #tpu.dot_dimension_numbers<[1], [0], [0], [1], [0, 0, 1, 1], [], []>} : vector<16x81xf32>, vector<81x128xf32>, vector<16x128xf32> -> vector<16x128xf32>
    %135 = arith.addf %129, %134 : vector<16x128xf32>
    %136 = arith.mulf %134, %134 : vector<16x128xf32>
    %137 = arith.addf %131, %136 : vector<16x128xf32>
    %c22 = arith.constant 22 : index
    %c0_70 = arith.constant 0 : index
    %c0_71 = arith.constant 0 : index
    %138 = vector.load %arg2[%c22, %c0_70, %c0_71] : memref<25x16x81xf32, #tpu.memory_space<vmem>>, vector<1x16x81xf32>
    %139 = vector.shape_cast %138 : vector<1x16x81xf32> to vector<16x81xf32>
    %cst_72 = arith.constant dense<0.000000e+00> : vector<16x128xf32>
    %140 = tpu.matmul %139, %3, %cst_72 {dimension_numbers = #tpu.dot_dimension_numbers<[1], [0], [0], [1], [0, 0, 1, 1], [], []>} : vector<16x81xf32>, vector<81x128xf32>, vector<16x128xf32> -> vector<16x128xf32>
    %141 = arith.addf %135, %140 : vector<16x128xf32>
    %142 = arith.mulf %140, %140 : vector<16x128xf32>
    %143 = arith.addf %137, %142 : vector<16x128xf32>
    %c23 = arith.constant 23 : index
    %c0_73 = arith.constant 0 : index
    %c0_74 = arith.constant 0 : index
    %144 = vector.load %arg2[%c23, %c0_73, %c0_74] : memref<25x16x81xf32, #tpu.memory_space<vmem>>, vector<1x16x81xf32>
    %145 = vector.shape_cast %144 : vector<1x16x81xf32> to vector<16x81xf32>
    %cst_75 = arith.constant dense<0.000000e+00> : vector<16x128xf32>
    %146 = tpu.matmul %145, %3, %cst_75 {dimension_numbers = #tpu.dot_dimension_numbers<[1], [0], [0], [1], [0, 0, 1, 1], [], []>} : vector<16x81xf32>, vector<81x128xf32>, vector<16x128xf32> -> vector<16x128xf32>
    %147 = arith.addf %141, %146 : vector<16x128xf32>
    %148 = arith.mulf %146, %146 : vector<16x128xf32>
    %149 = arith.addf %143, %148 : vector<16x128xf32>
    %c24 = arith.constant 24 : index
    %c0_76 = arith.constant 0 : index
    %c0_77 = arith.constant 0 : index
    %150 = vector.load %arg2[%c24, %c0_76, %c0_77] : memref<25x16x81xf32, #tpu.memory_space<vmem>>, vector<1x16x81xf32>
    %151 = vector.shape_cast %150 : vector<1x16x81xf32> to vector<16x81xf32>
    %cst_78 = arith.constant dense<0.000000e+00> : vector<16x128xf32>
    %152 = tpu.matmul %151, %3, %cst_78 {dimension_numbers = #tpu.dot_dimension_numbers<[1], [0], [0], [1], [0, 0, 1, 1], [], []>} : vector<16x81xf32>, vector<81x128xf32>, vector<16x128xf32> -> vector<16x128xf32>
    %153 = arith.addf %147, %152 : vector<16x128xf32>
    %154 = arith.mulf %152, %152 : vector<16x128xf32>
    %155 = arith.addf %149, %154 : vector<16x128xf32>
    %c0_79 = arith.constant 0 : index
    %c0_80 = arith.constant 0 : index
    %156 = vector.load %arg3[%c0_79, %c0_80] : memref<16x2xf32, #tpu.memory_space<vmem>>, vector<16x2xf32>
    %cst_81 = arith.constant dense<0.000000e+00> : vector<16xf32>
    %157 = vector.multi_reduction <add>, %153, %cst_81 [1] : vector<16x128xf32> to vector<16xf32>
    %158 = vector.shape_cast %157 : vector<16xf32> to vector<16x1xf32>
    %cst_82 = arith.constant dense<0.000000e+00> : vector<16xf32>
    %159 = vector.multi_reduction <add>, %155, %cst_82 [1] : vector<16x128xf32> to vector<16xf32>
    %160 = vector.shape_cast %159 : vector<16xf32> to vector<16x1xf32>
    %161 = tpu.concatenate %158, %160 in 1 : vector<16x1xf32>, vector<16x1xf32> -> vector<16x2xf32>
    %162 = arith.addf %156, %161 : vector<16x2xf32>
    %c0_83 = arith.constant 0 : index
    %c0_84 = arith.constant 0 : index
    %163 = vector.load %arg3[%c0_83, %c0_84] : memref<16x2xf32, #tpu.memory_space<vmem>>, vector<16x2xf32>
    tpu.vector_store %arg3[%c0_83, %c0_84], %162 {strides = array<i32>} : memref<16x2xf32, #tpu.memory_space<vmem>>, vector<16x2xf32>,
    return
  }
  func.func @transform_0(%arg0: i32) -> (i32, i32) {
    %c0_i32 = arith.constant 0 : i32
    %c0_i32_0 = arith.constant 0 : i32
    return %c0_i32, %arg0 : i32, i32
  }
  func.func @transform_1(%arg0: i32) -> (i32, i32, i32) {
    %c0_i32 = arith.constant 0 : i32
    %c0_i32_0 = arith.constant 0 : i32
    %c0_i32_1 = arith.constant 0 : i32
    %c0_i32_2 = arith.constant 0 : i32
    return %c0_i32, %c0_i32_0, %c0_i32_1 : i32, i32, i32
  }
  func.func @transform_2(%arg0: i32) -> (i32, i32) {
    %c0_i32 = arith.constant 0 : i32
    %c0_i32_0 = arith.constant 0 : i32
    %c0_i32_1 = arith.constant 0 : i32
    return %c0_i32, %c0_i32_0 : i32, i32
  }
}

</mosaic_0001>

<llo_original>
// kernel: tpu_custom_call.1
$region0: #{tpu_custom_call.1}
  #allocation0 [shape = 'u32[]', space=smem, size = 0x4, offset = 0x4, fixed_abs, tag = 'smem constant byte address 0x4 - core index']
  #allocation1 [shape = 'u32[72,128]{1,0:T(1,128)}', space=vmem, size = 0x9000, scoped, tag = 'internal scratch']
  %s0 = inlined_call_operand.hbm [shape: f32[81,128], index: 0, kind: input, shape index: {}]
  %s1 = inlined_call_operand.hbm [shape: f32[25,16,81], index: 1, kind: input, shape index: {}]
  %s2 = inlined_call_operand.vmem [shape: f32[16,2], index: 2, kind: output, shape index: {}]
  %s3 = sld [smem:[#allocation0]]
  $region30: #{tpu_custom_call.1} parent=0
    _
  %s5 = ssub.s32 1, %s3
  %s6 = scalar_select 0, %s5, %s3
  $region1: #{tpu_custom_call.1} parent=0
    #allocation2 [shape = 'u8[45056]{0}', space=vmem, size = 0xb000, scoped, tag = 'input window, operand 0, single buffered']
    #allocation3 [shape = 's32[1]{0}', space=sflag, size = 0x4, scoped, tag = 'scoped memory for tpu_custom_call.1']
    #allocation4 [shape = 'u8[204800]{0}', space=vmem, size = 0x32000, scoped, tag = 'input window, operand 1, single buffered']
    #allocation5 [shape = 's32[1]{0}', space=sflag, size = 0x4, scoped, tag = 'scoped memory for tpu_custom_call.1']
    %7 = vsyncpa [#allocation3], 0
    %8 = vsyncpa [#allocation5], 0
    // Predicated region
    $region2: #{tpu_custom_call.1} parent=1 // pred_check
      _
    $region3: #{tpu_custom_call.1} parent=1 // pred_check_branch
      %10 = sbr.rel (0) target = $region5
    $region4: #{tpu_custom_call.1} parent=1 // pred_region
      %12 = vsyncadd [#allocation3], 0
      %s13 = sshll.u32 %s0, 4
      %s14 = int_to_ptr.hbm [resolvable:$true] %s13
      %s15 = sshll.u32 [#allocation2], 4
      %s16 = int_to_ptr.vmem [resolvable:$true] %s15
      %21 = dma.hbm_to_vmem [thread:$0]  %s14, 1408, %s16, [#allocation3], 128, 128, 8
    $region5: #{tpu_custom_call.1} parent=1 // pred_fallthru
      _
    // Predicated region
    $region6: #{tpu_custom_call.1} parent=1 // pred_check
      _
    $region7: #{tpu_custom_call.1} parent=1 // pred_check_branch
      %23 = sbr.rel (0) target = $region9
    $region8: #{tpu_custom_call.1} parent=1 // pred_region
      %25 = vsyncadd [#allocation5], 0
      %s26 = sshll.u32 %s1, 4
      %s27 = int_to_ptr.hbm [resolvable:$true] %s26
      %s28 = sshll.u32 [#allocation4], 4
      %s29 = int_to_ptr.vmem [resolvable:$true] %s28
      %34 = dma.hbm_to_vmem [thread:$0]  %s27, 6400, %s29, [#allocation5], 128, 128, 8
    $region9: #{tpu_custom_call.1} parent=1 // pred_fallthru
      _
    // Predicated region
    $region10: #{tpu_custom_call.1} parent=1 // pred_check
      _
    $region11: #{tpu_custom_call.1} parent=1 // pred_check_branch
      %36 = sbr.rel (0) target = $region13
    $region12: #{tpu_custom_call.1} parent=1 // pred_region
      %38 = dma.done [#allocation3], 1408
    $region13: #{tpu_custom_call.1} parent=1 // pred_fallthru
      _
    // Predicated region
    $region14: #{tpu_custom_call.1} parent=1 // pred_check
      _
    $region15: #{tpu_custom_call.1} parent=1 // pred_check_branch
      %40 = sbr.rel (0) target = $region17
    $region16: #{tpu_custom_call.1} parent=1 // pred_region
      %42 = dma.done [#allocation5], 6400
    $region17: #{tpu_custom_call.1} parent=1 // pred_fallthru
      _
    %p43 = scmp.eq.s32.totalorder 0, 0
    // Predicated region
    $region18: #{tpu_custom_call.1} parent=1 // pred_check
      %p44 = pneg %p43
    $region19: #{tpu_custom_call.1} parent=1 // pred_check_branch
      %46 = sbr.rel (%p44) target = $region21
    $region20: #{tpu_custom_call.1} parent=1 // pred_region
      %vm47 = vcmask 15360
      %48 = vst.msk [vmem:[%s2] sm:$0xff] %vm47, 0.0
      %49 = vst.msk [vmem:[%s2 + $0x8] sm:$0xff] %vm47, 0.0
    $region21: #{tpu_custom_call.1} parent=1 // pred_fallthru
      _
    %v50 = vld [vmem:[#allocation2] sm:$0xff]
    %v51 = vld [vmem:[#allocation2 + $0x8] sm:$0xff]
    %v52 = vld [vmem:[#allocation2 + $0x10] sm:$0xff]
    %v53 = vld [vmem:[#allocation2 + $0x18] sm:$0xff]
    %v54 = vld [vmem:[#allocation2 + $0x20] sm:$0xff]
    %v55 = vld [vmem:[#allocation2 + $0x28] sm:$0xff]
    %v56 = vld [vmem:[#allocation2 + $0x30] sm:$0xff]
    %v57 = vld [vmem:[#allocation2 + $0x38] sm:$0xff]
    %v58 = vld [vmem:[#allocation2 + $0x40] sm:$0xff]
    %v59 = vld [vmem:[#allocation2 + $0x48] sm:$0xff]
    %v60 = vld [vmem:[#allocation2 + $0x50] sm:$0x1]
    %v61 = vld [vmem:[#allocation4] sm:$0xff]
    %v62 = vld [vmem:[#allocation4 + $0x8] sm:$0xff]
    %vm63 = vcmask 662528
    %v65 = vsel %vm63, %v61, 0
    %v68 = vsel %vm63, %v62, 0
    %vm70 = vcmask 1040384
    %v72 = vsel %vm70, %v60, 0
    %74 = vmatpush.msra.mxu0 0.0
    %75 = vmatpush.msra.mxu0 0.0
    %76 = vmatpush.msra.mxu0 0.0
    %77 = vmatpush.msra.mxu0 0.0
    %78 = vmatpush.msra.mxu0 0.0
    %79 = vmatpush.msra.mxu0 %v72
    %80 = vmatpush.msra.mxu0 %v59
    %81 = vmatpush.msra.mxu0 %v58
    %82 = vmatpush.msra.mxu0 %v57
    %83 = vmatpush.msra.mxu0 %v56
    %84 = vmatpush.msra.mxu0 %v55
    %85 = vmatpush.msra.mxu0 %v54
    %86 = vmatpush.msra.mxu0 %v53
    %87 = vmatpush.msra.mxu0 %v52
    %88 = vmatpush.msra.mxu0 %v51
    %89 = vmatpush.msra.mxu0 %v50
    %90 = vmatmul.f32.gmra.mxu0 %v65
    %v91 = vpop.f32.mrf.mxu0
    %v92 = vadd.f32 0.0, %v91
    %93 = vmatmul.f32.gmra.mxu0 %v68
    %v94 = vpop.f32.mrf.mxu0
    %v95 = vadd.f32 0.0, %v94
    %96 = vdwg.mxu0
    %v97 = vadd.f32 %v92, 0.0
    %v98 = vadd.f32 %v95, 0.0
    %v99 = vmul.f32 %v92, %v92
    %v100 = vmul.f32 %v95, %v95
    %v101 = vadd.f32 %v99, 0.0
    %v102 = vadd.f32 %v100, 0.0
    %s103 = scalar_lea.vmem [#allocation4], 16
    %v104 = vld [vmem:[%s103] sm:$0xff]
    %v105 = vld [vmem:[%s103 + $0x8] sm:$0xff]
    %v107 = vsel %vm63, %v104, 0
    %v110 = vsel %vm63, %v105, 0
    %112 = vmatpush.msra.mxu0 0.0
    %113 = vmatpush.msra.mxu0 0.0
    %114 = vmatpush.msra.mxu0 0.0
    %115 = vmatpush.msra.mxu0 0.0
    %116 = vmatpush.msra.mxu0 0.0
    %117 = vmatpush.msra.mxu0 %v72
    %118 = vmatpush.msra.mxu0 %v59
    %119 = vmatpush.msra.mxu0 %v58
    %120 = vmatpush.msra.mxu0 %v57
    %121 = vmatpush.msra.mxu0 %v56
    %122 = vmatpush.msra.mxu0 %v55
    %123 = vmatpush.msra.mxu0 %v54
    %124 = vmatpush.msra.mxu0 %v53
    %125 = vmatpush.msra.mxu0 %v52
    %126 = vmatpush.msra.mxu0 %v51
    %127 = vmatpush.msra.mxu0 %v50
    %128 = vmatmul.f32.gmra.mxu0 %v107
    %v129 = vpop.f32.mrf.mxu0
    %v130 = vadd.f32 0.0, %v129
    %131 = vmatmul.f32.gmra.mxu0 %v110
    %v132 = vpop.f32.mrf.mxu0
    %v133 = vadd.f32 0.0, %v132
    %134 = vdwg.mxu0
    %v135 = vadd.f32 %v97, %v130
    %v136 = vadd.f32 %v98, %v133
    %v137 = vmul.f32 %v130, %v130
    %v138 = vmul.f32 %v133, %v133
    %v139 = vadd.f32 %v101, %v137
    %v140 = vadd.f32 %v102, %v138
    %s141 = scalar_lea.vmem [#allocation4], 32
    %v142 = vld [vmem:[%s141] sm:$0xff]
    %v143 = vld [vmem:[%s141 + $0x8] sm:$0xff]
    %v145 = vsel %vm63, %v142, 0
    %v148 = vsel %vm63, %v143, 0
    %150 = vmatpush.msra.mxu0 0.0
    %151 = vmatpush.msra.mxu0 0.0
    %152 = vmatpush.msra.mxu0 0.0
    %153 = vmatpush.msra.mxu0 0.0
    %154 = vmatpush.msra.mxu0 0.0
    %155 = vmatpush.msra.mxu0 %v72
    %156 = vmatpush.msra.mxu0 %v59
    %157 = vmatpush.msra.mxu0 %v58
    %158 = vmatpush.msra.mxu0 %v57
    %159 = vmatpush.msra.mxu0 %v56
    %160 = vmatpush.msra.mxu0 %v55
    %161 = vmatpush.msra.mxu0 %v54
    %162 = vmatpush.msra.mxu0 %v53
    %163 = vmatpush.msra.mxu0 %v52
    %164 = vmatpush.msra.mxu0 %v51
    %165 = vmatpush.msra.mxu0 %v50
    %166 = vmatmul.f32.gmra.mxu0 %v145
    %v167 = vpop.f32.mrf.mxu0
    %v168 = vadd.f32 0.0, %v167
    %169 = vmatmul.f32.gmra.mxu0 %v148
    %v170 = vpop.f32.mrf.mxu0
    %v171 = vadd.f32 0.0, %v170
    %172 = vdwg.mxu0
    %v173 = vadd.f32 %v135, %v168
    %v174 = vadd.f32 %v136, %v171
    %v175 = vmul.f32 %v168, %v168
    %v176 = vmul.f32 %v171, %v171
    %v177 = vadd.f32 %v139, %v175
    %v178 = vadd.f32 %v140, %v176
    %s179 = scalar_lea.vmem [#allocation4], 48
    %v180 = vld [vmem:[%s179] sm:$0xff]
    %v181 = vld [vmem:[%s179 + $0x8] sm:$0xff]
    %v183 = vsel %vm63, %v180, 0
    %v186 = vsel %vm63, %v181, 0
    %188 = vmatpush.msra.mxu0 0.0
    %189 = vmatpush.msra.mxu0 0.0
    %190 = vmatpush.msra.mxu0 0.0
    %191 = vmatpush.msra.mxu0 0.0
    %192 = vmatpush.msra.mxu0 0.0
    %193 = vmatpush.msra.mxu0 %v72
    %194 = vmatpush.msra.mxu0 %v59
    %195 = vmatpush.msra.mxu0 %v58
    %196 = vmatpush.msra.mxu0 %v57
    %197 = vmatpush.msra.mxu0 %v56
    %198 = vmatpush.msra.mxu0 %v55
    %199 = vmatpush.msra.mxu0 %v54
    %200 = vmatpush.msra.mxu0 %v53
    %201 = vmatpush.msra.mxu0 %v52
    %202 = vmatpush.msra.mxu0 %v51
    %203 = vmatpush.msra.mxu0 %v50
    %204 = vmatmul.f32.gmra.mxu0 %v183
    %v205 = vpop.f32.mrf.mxu0
    %v206 = vadd.f32 0.0, %v205
    %207 = vmatmul.f32.gmra.mxu0 %v186
    %v208 = vpop.f32.mrf.mxu0
    %v209 = vadd.f32 0.0, %v208
    %210 = vdwg.mxu0
    %v211 = vadd.f32 %v173, %v206
    %v212 = vadd.f32 %v174, %v209
    %v213 = vmul.f32 %v206, %v206
    %v214 = vmul.f32 %v209, %v209
    %v215 = vadd.f32 %v177, %v213
    %v216 = vadd.f32 %v178, %v214
    %s217 = scalar_lea.vmem [#allocation4], 64
    %v218 = vld [vmem:[%s217] sm:$0xff]
    %v219 = vld [vmem:[%s217 + $0x8] sm:$0xff]
    %v221 = vsel %vm63, %v218, 0
    %v224 = vsel %vm63, %v219, 0
    %226 = vmatpush.msra.mxu0 0.0
    %227 = vmatpush.msra.mxu0 0.0
    %228 = vmatpush.msra.mxu0 0.0
    %229 = vmatpush.msra.mxu0 0.0
    %230 = vmatpush.msra.mxu0 0.0
    %231 = vmatpush.msra.mxu0 %v72
    %232 = vmatpush.msra.mxu0 %v59
    %233 = vmatpush.msra.mxu0 %v58
    %234 = vmatpush.msra.mxu0 %v57
    %235 = vmatpush.msra.mxu0 %v56
    %236 = vmatpush.msra.mxu0 %v55
    %237 = vmatpush.msra.mxu0 %v54
    %238 = vmatpush.msra.mxu0 %v53
    %239 = vmatpush.msra.mxu0 %v52
    %240 = vmatpush.msra.mxu0 %v51
    %241 = vmatpush.msra.mxu0 %v50
    %242 = vmatmul.f32.gmra.mxu0 %v221
    %v243 = vpop.f32.mrf.mxu0
    %v244 = vadd.f32 0.0, %v243
    %245 = vmatmul.f32.gmra.mxu0 %v224
    %v246 = vpop.f32.mrf.mxu0
    %v247 = vadd.f32 0.0, %v246
    %248 = vdwg.mxu0
    %v249 = vadd.f32 %v211, %v244
    %v250 = vadd.f32 %v212, %v247
    %v251 = vmul.f32 %v244, %v244
    %v252 = vmul.f32 %v247, %v247
    %v253 = vadd.f32 %v215, %v251
    %v254 = vadd.f32 %v216, %v252
    %s255 = scalar_lea.vmem [#allocation4], 80
    %v256 = vld [vmem:[%s255] sm:$0xff]
    %v257 = vld [vmem:[%s255 + $0x8] sm:$0xff]
    %v259 = vsel %vm63, %v256, 0
    %v262 = vsel %vm63, %v257, 0
    %264 = vmatpush.msra.mxu0 0.0
    %265 = vmatpush.msra.mxu0 0.0
    %266 = vmatpush.msra.mxu0 0.0
    %267 = vmatpush.msra.mxu0 0.0
    %268 = vmatpush.msra.mxu0 0.0
    %269 = vmatpush.msra.mxu0 %v72
    %270 = vmatpush.msra.mxu0 %v59
    %271 = vmatpush.msra.mxu0 %v58
    %272 = vmatpush.msra.mxu0 %v57
    %273 = vmatpush.msra.mxu0 %v56
    %274 = vmatpush.msra.mxu0 %v55
    %275 = vmatpush.msra.mxu0 %v54
    %276 = vmatpush.msra.mxu0 %v53
    %277 = vmatpush.msra.mxu0 %v52
    %278 = vmatpush.msra.mxu0 %v51
    %279 = vmatpush.msra.mxu0 %v50
    %280 = vmatmul.f32.gmra.mxu0 %v259
    %v281 = vpop.f32.mrf.mxu0
    %v282 = vadd.f32 0.0, %v281
    %283 = vmatmul.f32.gmra.mxu0 %v262
    %v284 = vpop.f32.mrf.mxu0
    %v285 = vadd.f32 0.0, %v284
    %286 = vdwg.mxu0
    %v287 = vadd.f32 %v249, %v282
    %v288 = vadd.f32 %v250, %v285
    %v289 = vmul.f32 %v282, %v282
    %v290 = vmul.f32 %v285, %v285
    %v291 = vadd.f32 %v253, %v289
    %v292 = vadd.f32 %v254, %v290
    %s293 = scalar_lea.vmem [#allocation4], 96
    %v294 = vld [vmem:[%s293] sm:$0xff]
    %v295 = vld [vmem:[%s293 + $0x8] sm:$0xff]
    %v297 = vsel %vm63, %v294, 0
    %v300 = vsel %vm63, %v295, 0
    %302 = vmatpush.msra.mxu0 0.0
    %303 = vmatpush.msra.mxu0 0.0
    %304 = vmatpush.msra.mxu0 0.0
    %305 = vmatpush.msra.mxu0 0.0
    %306 = vmatpush.msra.mxu0 0.0
    %307 = vmatpush.msra.mxu0 %v72
    %308 = vmatpush.msra.mxu0 %v59
    %309 = vmatpush.msra.mxu0 %v58
    %310 = vmatpush.msra.mxu0 %v57
    %311 = vmatpush.msra.mxu0 %v56
    %312 = vmatpush.msra.mxu0 %v55
    %313 = vmatpush.msra.mxu0 %v54
    %314 = vmatpush.msra.mxu0 %v53
    %315 = vmatpush.msra.mxu0 %v52
    %316 = vmatpush.msra.mxu0 %v51
    %317 = vmatpush.msra.mxu0 %v50
    %318 = vmatmul.f32.gmra.mxu0 %v297
    %v319 = vpop.f32.mrf.mxu0
    %v320 = vadd.f32 0.0, %v319
    %321 = vmatmul.f32.gmra.mxu0 %v300
    %v322 = vpop.f32.mrf.mxu0
    %v323 = vadd.f32 0.0, %v322
    %324 = vdwg.mxu0
    %v325 = vadd.f32 %v287, %v320
    %v326 = vadd.f32 %v288, %v323
    %v327 = vmul.f32 %v320, %v320
    %v328 = vmul.f32 %v323, %v323
    %v329 = vadd.f32 %v291, %v327
    %v330 = vadd.f32 %v292, %v328
    %s331 = scalar_lea.vmem [#allocation4], 112
    %v332 = vld [vmem:[%s331] sm:$0xff]
    %v333 = vld [vmem:[%s331 + $0x8] sm:$0xff]
    %v335 = vsel %vm63, %v332, 0
    %v338 = vsel %vm63, %v333, 0
    %340 = vmatpush.msra.mxu0 0.0
    %341 = vmatpush.msra.mxu0 0.0
    %342 = vmatpush.msra.mxu0 0.0
    %343 = vmatpush.msra.mxu0 0.0
    %344 = vmatpush.msra.mxu0 0.0
    %345 = vmatpush.msra.mxu0 %v72
    %346 = vmatpush.msra.mxu0 %v59
    %347 = vmatpush.msra.mxu0 %v58
    %348 = vmatpush.msra.mxu0 %v57
    %349 = vmatpush.msra.mxu0 %v56
    %350 = vmatpush.msra.mxu0 %v55
    %351 = vmatpush.msra.mxu0 %v54
    %352 = vmatpush.msra.mxu0 %v53
    %353 = vmatpush.msra.mxu0 %v52
    %354 = vmatpush.msra.mxu0 %v51
    %355 = vmatpush.msra.mxu0 %v50
    %356 = vmatmul.f32.gmra.mxu0 %v335
    %v357 = vpop.f32.mrf.mxu0
    %v358 = vadd.f32 0.0, %v357
    %359 = vmatmul.f32.gmra.mxu0 %v338
    %v360 = vpop.f32.mrf.mxu0
    %v361 = vadd.f32 0.0, %v360
    %362 = vdwg.mxu0
    %v363 = vadd.f32 %v325, %v358
    %v364 = vadd.f32 %v326, %v361
    %v365 = vmul.f32 %v358, %v358
    %v366 = vmul.f32 %v361, %v361
    %v367 = vadd.f32 %v329, %v365
    %v368 = vadd.f32 %v330, %v366
    %s369 = scalar_lea.vmem [#allocation4], 128
    %v370 = vld [vmem:[%s369] sm:$0xff]
    %v371 = vld [vmem:[%s369 + $0x8] sm:$0xff]
    %v373 = vsel %vm63, %v370, 0
    %v376 = vsel %vm63, %v371, 0
    %378 = vmatpush.msra.mxu0 0.0
    %379 = vmatpush.msra.mxu0 0.0
    %380 = vmatpush.msra.mxu0 0.0
    %381 = vmatpush.msra.mxu0 0.0
    %382 = vmatpush.msra.mxu0 0.0
    %383 = vmatpush.msra.mxu0 %v72
    %384 = vmatpush.msra.mxu0 %v59
    %385 = vmatpush.msra.mxu0 %v58
    %386 = vmatpush.msra.mxu0 %v57
    %387 = vmatpush.msra.mxu0 %v56
    %388 = vmatpush.msra.mxu0 %v55
    %389 = vmatpush.msra.mxu0 %v54
    %390 = vmatpush.msra.mxu0 %v53
    %391 = vmatpush.msra.mxu0 %v52
    %392 = vmatpush.msra.mxu0 %v51
    %393 = vmatpush.msra.mxu0 %v50
    %394 = vmatmul.f32.gmra.mxu0 %v373
    %v395 = vpop.f32.mrf.mxu0
    %v396 = vadd.f32 0.0, %v395
    %397 = vmatmul.f32.gmra.mxu0 %v376
    %v398 = vpop.f32.mrf.mxu0
    %v399 = vadd.f32 0.0, %v398
    %400 = vdwg.mxu0
    %v401 = vadd.f32 %v363, %v396
    %v402 = vadd.f32 %v364, %v399
    %v403 = vmul.f32 %v396, %v396
    %v404 = vmul.f32 %v399, %v399
    %v405 = vadd.f32 %v367, %v403
    %v406 = vadd.f32 %v368, %v404
    %s407 = scalar_lea.vmem [#allocation4], 144
    %v408 = vld [vmem:[%s407] sm:$0xff]
    %v409 = vld [vmem:[%s407 + $0x8] sm:$0xff]
    %v411 = vsel %vm63, %v408, 0
    %v414 = vsel %vm63, %v409, 0
    %416 = vmatpush.msra.mxu0 0.0
    %417 = vmatpush.msra.mxu0 0.0
    %418 = vmatpush.msra.mxu0 0.0
    %419 = vmatpush.msra.mxu0 0.0
    %420 = vmatpush.msra.mxu0 0.0
    %421 = vmatpush.msra.mxu0 %v72
    %422 = vmatpush.msra.mxu0 %v59
    %423 = vmatpush.msra.mxu0 %v58
    %424 = vmatpush.msra.mxu0 %v57
    %425 = vmatpush.msra.mxu0 %v56
    %426 = vmatpush.msra.mxu0 %v55
    %427 = vmatpush.msra.mxu0 %v54
    %428 = vmatpush.msra.mxu0 %v53
    %429 = vmatpush.msra.mxu0 %v52
    %430 = vmatpush.msra.mxu0 %v51
    %431 = vmatpush.msra.mxu0 %v50
    %432 = vmatmul.f32.gmra.mxu0 %v411
    %v433 = vpop.f32.mrf.mxu0
    %v434 = vadd.f32 0.0, %v433
    %435 = vmatmul.f32.gmra.mxu0 %v414
    %v436 = vpop.f32.mrf.mxu0
    %v437 = vadd.f32 0.0, %v436
    %438 = vdwg.mxu0
    %v439 = vadd.f32 %v401, %v434
    %v440 = vadd.f32 %v402, %v437
    %v441 = vmul.f32 %v434, %v434
    %v442 = vmul.f32 %v437, %v437
    %v443 = vadd.f32 %v405, %v441
    %v444 = vadd.f32 %v406, %v442
    %s445 = scalar_lea.vmem [#allocation4], 160
    %v446 = vld [vmem:[%s445] sm:$0xff]
    %v447 = vld [vmem:[%s445 + $0x8] sm:$0xff]
    %v449 = vsel %vm63, %v446, 0
    %v452 = vsel %vm63, %v447, 0
    %454 = vmatpush.msra.mxu0 0.0
    %455 = vmatpush.msra.mxu0 0.0
    %456 = vmatpush.msra.mxu0 0.0
    %457 = vmatpush.msra.mxu0 0.0
    %458 = vmatpush.msra.mxu0 0.0
    %459 = vmatpush.msra.mxu0 %v72
    %460 = vmatpush.msra.mxu0 %v59
    %461 = vmatpush.msra.mxu0 %v58
    %462 = vmatpush.msra.mxu0 %v57
    %463 = vmatpush.msra.mxu0 %v56
    %464 = vmatpush.msra.mxu0 %v55
    %465 = vmatpush.msra.mxu0 %v54
    %466 = vmatpush.msra.mxu0 %v53
    %467 = vmatpush.msra.mxu0 %v52
    %468 = vmatpush.msra.mxu0 %v51
    %469 = vmatpush.msra.mxu0 %v50
    %470 = vmatmul.f32.gmra.mxu0 %v449
    %v471 = vpop.f32.mrf.mxu0
    %v472 = vadd.f32 0.0, %v471
    %473 = vmatmul.f32.gmra.mxu0 %v452
    %v474 = vpop.f32.mrf.mxu0
    %v475 = vadd.f32 0.0, %v474
    %476 = vdwg.mxu0
    %v477 = vadd.f32 %v439, %v472
    %v478 = vadd.f32 %v440, %v475
    %v479 = vmul.f32 %v472, %v472
    %v480 = vmul.f32 %v475, %v475
    %v481 = vadd.f32 %v443, %v479
    %v482 = vadd.f32 %v444, %v480
    %s483 = scalar_lea.vmem [#allocation4], 176
    %v484 = vld [vmem:[%s483] sm:$0xff]
    %v485 = vld [vmem:[%s483 + $0x8] sm:$0xff]
    %v487 = vsel %vm63, %v484, 0
    %v490 = vsel %vm63, %v485, 0
    %492 = vmatpush.msra.mxu0 0.0
    %493 = vmatpush.msra.mxu0 0.0
    %494 = vmatpush.msra.mxu0 0.0
    %495 = vmatpush.msra.mxu0 0.0
    %496 = vmatpush.msra.mxu0 0.0
    %497 = vmatpush.msra.mxu0 %v72
    %498 = vmatpush.msra.mxu0 %v59
    %499 = vmatpush.msra.mxu0 %v58
    %500 = vmatpush.msra.mxu0 %v57
    %501 = vmatpush.msra.mxu0 %v56
    %502 = vmatpush.msra.mxu0 %v55
    %503 = vmatpush.msra.mxu0 %v54
    %504 = vmatpush.msra.mxu0 %v53
    %505 = vmatpush.msra.mxu0 %v52
    %506 = vmatpush.msra.mxu0 %v51
    %507 = vmatpush.msra.mxu0 %v50
    %508 = vmatmul.f32.gmra.mxu0 %v487
    %v509 = vpop.f32.mrf.mxu0
    %v510 = vadd.f32 0.0, %v509
    %511 = vmatmul.f32.gmra.mxu0 %v490
    %v512 = vpop.f32.mrf.mxu0
    %v513 = vadd.f32 0.0, %v512
    %514 = vdwg.mxu0
    %v515 = vadd.f32 %v477, %v510
    %v516 = vadd.f32 %v478, %v513
    %v517 = vmul.f32 %v510, %v510
    %v518 = vmul.f32 %v513, %v513
    %v519 = vadd.f32 %v481, %v517
    %v520 = vadd.f32 %v482, %v518
    %s521 = scalar_lea.vmem [#allocation4], 192
    %v522 = vld [vmem:[%s521] sm:$0xff]
    %v523 = vld [vmem:[%s521 + $0x8] sm:$0xff]
    %v525 = vsel %vm63, %v522, 0
    %v528 = vsel %vm63, %v523, 0
    %530 = vmatpush.msra.mxu0 0.0
    %531 = vmatpush.msra.mxu0 0.0
    %532 = vmatpush.msra.mxu0 0.0
    %533 = vmatpush.msra.mxu0 0.0
    %534 = vmatpush.msra.mxu0 0.0
    %535 = vmatpush.msra.mxu0 %v72
    %536 = vmatpush.msra.mxu0 %v59
    %537 = vmatpush.msra.mxu0 %v58
    %538 = vmatpush.msra.mxu0 %v57
    %539 = vmatpush.msra.mxu0 %v56
    %540 = vmatpush.msra.mxu0 %v55
    %541 = vmatpush.msra.mxu0 %v54
    %542 = vmatpush.msra.mxu0 %v53
    %543 = vmatpush.msra.mxu0 %v52
    %544 = vmatpush.msra.mxu0 %v51
    %545 = vmatpush.msra.mxu0 %v50
    %546 = vmatmul.f32.gmra.mxu0 %v525
    %v547 = vpop.f32.mrf.mxu0
    %v548 = vadd.f32 0.0, %v547
    %549 = vmatmul.f32.gmra.mxu0 %v528
    %v550 = vpop.f32.mrf.mxu0
    %v551 = vadd.f32 0.0, %v550
    %552 = vdwg.mxu0
    %v553 = vadd.f32 %v515, %v548
    %v554 = vadd.f32 %v516, %v551
    %v555 = vmul.f32 %v548, %v548
    %v556 = vmul.f32 %v551, %v551
    %v557 = vadd.f32 %v519, %v555
    %v558 = vadd.f32 %v520, %v556
    %s559 = scalar_lea.vmem [#allocation4], 208
    %v560 = vld [vmem:[%s559] sm:$0xff]
    %v561 = vld [vmem:[%s559 + $0x8] sm:$0xff]
    %v563 = vsel %vm63, %v560, 0
    %v566 = vsel %vm63, %v561, 0
    %568 = vmatpush.msra.mxu0 0.0
    %569 = vmatpush.msra.mxu0 0.0
    %570 = vmatpush.msra.mxu0 0.0
    %571 = vmatpush.msra.mxu0 0.0
    %572 = vmatpush.msra.mxu0 0.0
    %573 = vmatpush.msra.mxu0 %v72
    %574 = vmatpush.msra.mxu0 %v59
    %575 = vmatpush.msra.mxu0 %v58
    %576 = vmatpush.msra.mxu0 %v57
    %577 = vmatpush.msra.mxu0 %v56
    %578 = vmatpush.msra.mxu0 %v55
    %579 = vmatpush.msra.mxu0 %v54
    %580 = vmatpush.msra.mxu0 %v53
    %581 = vmatpush.msra.mxu0 %v52
    %582 = vmatpush.msra.mxu0 %v51
    %583 = vmatpush.msra.mxu0 %v50
    %584 = vmatmul.f32.gmra.mxu0 %v563
    %v585 = vpop.f32.mrf.mxu0
    %v586 = vadd.f32 0.0, %v585
    %587 = vmatmul.f32.gmra.mxu0 %v566
    %v588 = vpop.f32.mrf.mxu0
    %v589 = vadd.f32 0.0, %v588
    %590 = vdwg.mxu0
    %v591 = vadd.f32 %v553, %v586
    %v592 = vadd.f32 %v554, %v589
    %v593 = vmul.f32 %v586, %v586
    %v594 = vmul.f32 %v589, %v589
    %v595 = vadd.f32 %v557, %v593
    %v596 = vadd.f32 %v558, %v594
    %s597 = scalar_lea.vmem [#allocation4], 224
    %v598 = vld [vmem:[%s597] sm:$0xff]
    %v599 = vld [vmem:[%s597 + $0x8] sm:$0xff]
    %v601 = vsel %vm63, %v598, 0
    %v604 = vsel %vm63, %v599, 0
    %606 = vmatpush.msra.mxu0 0.0
    %607 = vmatpush.msra.mxu0 0.0
    %608 = vmatpush.msra.mxu0 0.0
    %609 = vmatpush.msra.mxu0 0.0
    %610 = vmatpush.msra.mxu0 0.0
    %611 = vmatpush.msra.mxu0 %v72
    %612 = vmatpush.msra.mxu0 %v59
    %613 = vmatpush.msra.mxu0 %v58
    %614 = vmatpush.msra.mxu0 %v57
    %615 = vmatpush.msra.mxu0 %v56
    %616 = vmatpush.msra.mxu0 %v55
    %617 = vmatpush.msra.mxu0 %v54
    %618 = vmatpush.msra.mxu0 %v53
    %619 = vmatpush.msra.mxu0 %v52
    %620 = vmatpush.msra.mxu0 %v51
    %621 = vmatpush.msra.mxu0 %v50
    %622 = vmatmul.f32.gmra.mxu0 %v601
    %v623 = vpop.f32.mrf.mxu0
    %v624 = vadd.f32 0.0, %v623
    %625 = vmatmul.f32.gmra.mxu0 %v604
    %v626 = vpop.f32.mrf.mxu0
    %v627 = vadd.f32 0.0, %v626
    %628 = vdwg.mxu0
    %v629 = vadd.f32 %v591, %v624
    %v630 = vadd.f32 %v592, %v627
    %v631 = vmul.f32 %v624, %v624
    %v632 = vmul.f32 %v627, %v627
    %v633 = vadd.f32 %v595, %v631
    %v634 = vadd.f32 %v596, %v632
    %s635 = scalar_lea.vmem [#allocation4], 240
    %v636 = vld [vmem:[%s635] sm:$0xff]
    %v637 = vld [vmem:[%s635 + $0x8] sm:$0xff]
    %v639 = vsel %vm63, %v636, 0
    %v642 = vsel %vm63, %v637, 0
    %644 = vmatpush.msra.mxu0 0.0
    %645 = vmatpush.msra.mxu0 0.0
    %646 = vmatpush.msra.mxu0 0.0
    %647 = vmatpush.msra.mxu0 0.0
    %648 = vmatpush.msra.mxu0 0.0
    %649 = vmatpush.msra.mxu0 %v72
    %650 = vmatpush.msra.mxu0 %v59
    %651 = vmatpush.msra.mxu0 %v58
    %652 = vmatpush.msra.mxu0 %v57
    %653 = vmatpush.msra.mxu0 %v56
    %654 = vmatpush.msra.mxu0 %v55
    %655 = vmatpush.msra.mxu0 %v54
    %656 = vmatpush.msra.mxu0 %v53
    %657 = vmatpush.msra.mxu0 %v52
    %658 = vmatpush.msra.mxu0 %v51
    %659 = vmatpush.msra.mxu0 %v50
    %660 = vmatmul.f32.gmra.mxu0 %v639
    %v661 = vpop.f32.mrf.mxu0
    %v662 = vadd.f32 0.0, %v661
    %663 = vmatmul.f32.gmra.mxu0 %v642
    %v664 = vpop.f32.mrf.mxu0
    %v665 = vadd.f32 0.0, %v664
    %666 = vdwg.mxu0
    %v667 = vadd.f32 %v629, %v662
    %v668 = vadd.f32 %v630, %v665
    %v669 = vmul.f32 %v662, %v662
    %v670 = vmul.f32 %v665, %v665
    %v671 = vadd.f32 %v633, %v669
    %v672 = vadd.f32 %v634, %v670
    %s673 = scalar_lea.vmem [#allocation4], 256
    %v674 = vld [vmem:[%s673] sm:$0xff]
    %v675 = vld [vmem:[%s673 + $0x8] sm:$0xff]
    %v677 = vsel %vm63, %v674, 0
    %v680 = vsel %vm63, %v675, 0
    %682 = vmatpush.msra.mxu0 0.0
    %683 = vmatpush.msra.mxu0 0.0
    %684 = vmatpush.msra.mxu0 0.0
    %685 = vmatpush.msra.mxu0 0.0
    %686 = vmatpush.msra.mxu0 0.0
    %687 = vmatpush.msra.mxu0 %v72
    %688 = vmatpush.msra.mxu0 %v59
    %689 = vmatpush.msra.mxu0 %v58
    %690 = vmatpush.msra.mxu0 %v57
    %691 = vmatpush.msra.mxu0 %v56
    %692 = vmatpush.msra.mxu0 %v55
    %693 = vmatpush.msra.mxu0 %v54
    %694 = vmatpush.msra.mxu0 %v53
    %695 = vmatpush.msra.mxu0 %v52
    %696 = vmatpush.msra.mxu0 %v51
    %697 = vmatpush.msra.mxu0 %v50
    %698 = vmatmul.f32.gmra.mxu0 %v677
    %v699 = vpop.f32.mrf.mxu0
    %v700 = vadd.f32 0.0, %v699
    %701 = vmatmul.f32.gmra.mxu0 %v680
    %v702 = vpop.f32.mrf.mxu0
    %v703 = vadd.f32 0.0, %v702
    %704 = vdwg.mxu0
    %v705 = vadd.f32 %v667, %v700
    %v706 = vadd.f32 %v668, %v703
    %v707 = vmul.f32 %v700, %v700
    %v708 = vmul.f32 %v703, %v703
    %v709 = vadd.f32 %v671, %v707
    %v710 = vadd.f32 %v672, %v708
    %s711 = scalar_lea.vmem [#allocation4], 272
    %v712 = vld [vmem:[%s711] sm:$0xff]
    %v713 = vld [vmem:[%s711 + $0x8] sm:$0xff]
    %v715 = vsel %vm63, %v712, 0
    %v718 = vsel %vm63, %v713, 0
    %720 = vmatpush.msra.mxu0 0.0
    %721 = vmatpush.msra.mxu0 0.0
    %722 = vmatpush.msra.mxu0 0.0
    %723 = vmatpush.msra.mxu0 0.0
    %724 = vmatpush.msra.mxu0 0.0
    %725 = vmatpush.msra.mxu0 %v72
    %726 = vmatpush.msra.mxu0 %v59
    %727 = vmatpush.msra.mxu0 %v58
    %728 = vmatpush.msra.mxu0 %v57
    %729 = vmatpush.msra.mxu0 %v56
    %730 = vmatpush.msra.mxu0 %v55
    %731 = vmatpush.msra.mxu0 %v54
    %732 = vmatpush.msra.mxu0 %v53
    %733 = vmatpush.msra.mxu0 %v52
    %734 = vmatpush.msra.mxu0 %v51
    %735 = vmatpush.msra.mxu0 %v50
    %736 = vmatmul.f32.gmra.mxu0 %v715
    %v737 = vpop.f32.mrf.mxu0
    %v738 = vadd.f32 0.0, %v737
    %739 = vmatmul.f32.gmra.mxu0 %v718
    %v740 = vpop.f32.mrf.mxu0
    %v741 = vadd.f32 0.0, %v740
    %742 = vdwg.mxu0
    %v743 = vadd.f32 %v705, %v738
    %v744 = vadd.f32 %v706, %v741
    %v745 = vmul.f32 %v738, %v738
    %v746 = vmul.f32 %v741, %v741
    %v747 = vadd.f32 %v709, %v745
    %v748 = vadd.f32 %v710, %v746
    %s749 = scalar_lea.vmem [#allocation4], 288
    %v750 = vld [vmem:[%s749] sm:$0xff]
    %v751 = vld [vmem:[%s749 + $0x8] sm:$0xff]
    %v753 = vsel %vm63, %v750, 0
    %v756 = vsel %vm63, %v751, 0
    %758 = vmatpush.msra.mxu0 0.0
    %759 = vmatpush.msra.mxu0 0.0
    %760 = vmatpush.msra.mxu0 0.0
    %761 = vmatpush.msra.mxu0 0.0
    %762 = vmatpush.msra.mxu0 0.0
    %763 = vmatpush.msra.mxu0 %v72
    %764 = vmatpush.msra.mxu0 %v59
    %765 = vmatpush.msra.mxu0 %v58
    %766 = vmatpush.msra.mxu0 %v57
    %767 = vmatpush.msra.mxu0 %v56
    %768 = vmatpush.msra.mxu0 %v55
    %769 = vmatpush.msra.mxu0 %v54
    %770 = vmatpush.msra.mxu0 %v53
    %771 = vmatpush.msra.mxu0 %v52
    %772 = vmatpush.msra.mxu0 %v51
    %773 = vmatpush.msra.mxu0 %v50
    %774 = vmatmul.f32.gmra.mxu0 %v753
    %v775 = vpop.f32.mrf.mxu0
    %v776 = vadd.f32 0.0, %v775
    %777 = vmatmul.f32.gmra.mxu0 %v756
    %v778 = vpop.f32.mrf.mxu0
    %v779 = vadd.f32 0.0, %v778
    %780 = vdwg.mxu0
    %v781 = vadd.f32 %v743, %v776
    %v782 = vadd.f32 %v744, %v779
    %v783 = vmul.f32 %v776, %v776
    %v784 = vmul.f32 %v779, %v779
    %v785 = vadd.f32 %v747, %v783
    %v786 = vadd.f32 %v748, %v784
    %s787 = scalar_lea.vmem [#allocation4], 304
    %v788 = vld [vmem:[%s787] sm:$0xff]
    %v789 = vld [vmem:[%s787 + $0x8] sm:$0xff]
    %v791 = vsel %vm63, %v788, 0
    %v794 = vsel %vm63, %v789, 0
    %796 = vmatpush.msra.mxu0 0.0
    %797 = vmatpush.msra.mxu0 0.0
    %798 = vmatpush.msra.mxu0 0.0
    %799 = vmatpush.msra.mxu0 0.0
    %800 = vmatpush.msra.mxu0 0.0
    %801 = vmatpush.msra.mxu0 %v72
    %802 = vmatpush.msra.mxu0 %v59
    %803 = vmatpush.msra.mxu0 %v58
    %804 = vmatpush.msra.mxu0 %v57
    %805 = vmatpush.msra.mxu0 %v56
    %806 = vmatpush.msra.mxu0 %v55
    %807 = vmatpush.msra.mxu0 %v54
    %808 = vmatpush.msra.mxu0 %v53
    %809 = vmatpush.msra.mxu0 %v52
    %810 = vmatpush.msra.mxu0 %v51
    %811 = vmatpush.msra.mxu0 %v50
    %812 = vmatmul.f32.gmra.mxu0 %v791
    %v813 = vpop.f32.mrf.mxu0
    %v814 = vadd.f32 0.0, %v813
    %815 = vmatmul.f32.gmra.mxu0 %v794
    %v816 = vpop.f32.mrf.mxu0
    %v817 = vadd.f32 0.0, %v816
    %818 = vdwg.mxu0
    %v819 = vadd.f32 %v781, %v814
    %v820 = vadd.f32 %v782, %v817
    %v821 = vmul.f32 %v814, %v814
    %v822 = vmul.f32 %v817, %v817
    %v823 = vadd.f32 %v785, %v821
    %v824 = vadd.f32 %v786, %v822
    %s825 = scalar_lea.vmem [#allocation4], 320
    %v826 = vld [vmem:[%s825] sm:$0xff]
    %v827 = vld [vmem:[%s825 + $0x8] sm:$0xff]
    %v829 = vsel %vm63, %v826, 0
    %v832 = vsel %vm63, %v827, 0
    %834 = vmatpush.msra.mxu0 0.0
    %835 = vmatpush.msra.mxu0 0.0
    %836 = vmatpush.msra.mxu0 0.0
    %837 = vmatpush.msra.mxu0 0.0
    %838 = vmatpush.msra.mxu0 0.0
    %839 = vmatpush.msra.mxu0 %v72
    %840 = vmatpush.msra.mxu0 %v59
    %841 = vmatpush.msra.mxu0 %v58
    %842 = vmatpush.msra.mxu0 %v57
    %843 = vmatpush.msra.mxu0 %v56
    %844 = vmatpush.msra.mxu0 %v55
    %845 = vmatpush.msra.mxu0 %v54
    %846 = vmatpush.msra.mxu0 %v53
    %847 = vmatpush.msra.mxu0 %v52
    %848 = vmatpush.msra.mxu0 %v51
    %849 = vmatpush.msra.mxu0 %v50
    %850 = vmatmul.f32.gmra.mxu0 %v829
    %v851 = vpop.f32.mrf.mxu0
    %v852 = vadd.f32 0.0, %v851
    %853 = vmatmul.f32.gmra.mxu0 %v832
    %v854 = vpop.f32.mrf.mxu0
    %v855 = vadd.f32 0.0, %v854
    %856 = vdwg.mxu0
    %v857 = vadd.f32 %v819, %v852
    %v858 = vadd.f32 %v820, %v855
    %v859 = vmul.f32 %v852, %v852
    %v860 = vmul.f32 %v855, %v855
    %v861 = vadd.f32 %v823, %v859
    %v862 = vadd.f32 %v824, %v860
    %s863 = scalar_lea.vmem [#allocation4], 336
    %v864 = vld [vmem:[%s863] sm:$0xff]
    %v865 = vld [vmem:[%s863 + $0x8] sm:$0xff]
    %v867 = vsel %vm63, %v864, 0
    %v870 = vsel %vm63, %v865, 0
    %872 = vmatpush.msra.mxu0 0.0
    %873 = vmatpush.msra.mxu0 0.0
    %874 = vmatpush.msra.mxu0 0.0
    %875 = vmatpush.msra.mxu0 0.0
    %876 = vmatpush.msra.mxu0 0.0
    %877 = vmatpush.msra.mxu0 %v72
    %878 = vmatpush.msra.mxu0 %v59
    %879 = vmatpush.msra.mxu0 %v58
    %880 = vmatpush.msra.mxu0 %v57
    %881 = vmatpush.msra.mxu0 %v56
    %882 = vmatpush.msra.mxu0 %v55
    %883 = vmatpush.msra.mxu0 %v54
    %884 = vmatpush.msra.mxu0 %v53
    %885 = vmatpush.msra.mxu0 %v52
    %886 = vmatpush.msra.mxu0 %v51
    %887 = vmatpush.msra.mxu0 %v50
    %888 = vmatmul.f32.gmra.mxu0 %v867
    %v889 = vpop.f32.mrf.mxu0
    %v890 = vadd.f32 0.0, %v889
    %891 = vmatmul.f32.gmra.mxu0 %v870
    %v892 = vpop.f32.mrf.mxu0
    %v893 = vadd.f32 0.0, %v892
    %894 = vdwg.mxu0
    %v895 = vadd.f32 %v857, %v890
    %v896 = vadd.f32 %v858, %v893
    %v897 = vmul.f32 %v890, %v890
    %v898 = vmul.f32 %v893, %v893
    %v899 = vadd.f32 %v861, %v897
    %v900 = vadd.f32 %v862, %v898
    %s901 = scalar_lea.vmem [#allocation4], 352
    %v902 = vld [vmem:[%s901] sm:$0xff]
    %v903 = vld [vmem:[%s901 + $0x8] sm:$0xff]
    %v905 = vsel %vm63, %v902, 0
    %v908 = vsel %vm63, %v903, 0
    %910 = vmatpush.msra.mxu0 0.0
    %911 = vmatpush.msra.mxu0 0.0
    %912 = vmatpush.msra.mxu0 0.0
    %913 = vmatpush.msra.mxu0 0.0
    %914 = vmatpush.msra.mxu0 0.0
    %915 = vmatpush.msra.mxu0 %v72
    %916 = vmatpush.msra.mxu0 %v59
    %917 = vmatpush.msra.mxu0 %v58
    %918 = vmatpush.msra.mxu0 %v57
    %919 = vmatpush.msra.mxu0 %v56
    %920 = vmatpush.msra.mxu0 %v55
    %921 = vmatpush.msra.mxu0 %v54
    %922 = vmatpush.msra.mxu0 %v53
    %923 = vmatpush.msra.mxu0 %v52
    %924 = vmatpush.msra.mxu0 %v51
    %925 = vmatpush.msra.mxu0 %v50
    %926 = vmatmul.f32.gmra.mxu0 %v905
    %v927 = vpop.f32.mrf.mxu0
    %v928 = vadd.f32 0.0, %v927
    %929 = vmatmul.f32.gmra.mxu0 %v908
    %v930 = vpop.f32.mrf.mxu0
    %v931 = vadd.f32 0.0, %v930
    %932 = vdwg.mxu0
    %v933 = vadd.f32 %v895, %v928
    %v934 = vadd.f32 %v896, %v931
    %v935 = vmul.f32 %v928, %v928
    %v936 = vmul.f32 %v931, %v931
    %v937 = vadd.f32 %v899, %v935
    %v938 = vadd.f32 %v900, %v936
    %s939 = scalar_lea.vmem [#allocation4], 368
    %v940 = vld [vmem:[%s939] sm:$0xff]
    %v941 = vld [vmem:[%s939 + $0x8] sm:$0xff]
    %v943 = vsel %vm63, %v940, 0
    %v946 = vsel %vm63, %v941, 0
    %948 = vmatpush.msra.mxu0 0.0
    %949 = vmatpush.msra.mxu0 0.0
    %950 = vmatpush.msra.mxu0 0.0
    %951 = vmatpush.msra.mxu0 0.0
    %952 = vmatpush.msra.mxu0 0.0
    %953 = vmatpush.msra.mxu0 %v72
    %954 = vmatpush.msra.mxu0 %v59
    %955 = vmatpush.msra.mxu0 %v58
    %956 = vmatpush.msra.mxu0 %v57
    %957 = vmatpush.msra.mxu0 %v56
    %958 = vmatpush.msra.mxu0 %v55
    %959 = vmatpush.msra.mxu0 %v54
    %960 = vmatpush.msra.mxu0 %v53
    %961 = vmatpush.msra.mxu0 %v52
    %962 = vmatpush.msra.mxu0 %v51
    %963 = vmatpush.msra.mxu0 %v50
    %964 = vmatmul.f32.gmra.mxu0 %v943
    %v965 = vpop.f32.mrf.mxu0
    %v966 = vadd.f32 0.0, %v965
    %967 = vmatmul.f32.gmra.mxu0 %v946
    %v968 = vpop.f32.mrf.mxu0
    %v969 = vadd.f32 0.0, %v968
    %970 = vdwg.mxu0
    %v971 = vadd.f32 %v933, %v966
    %v972 = vadd.f32 %v934, %v969
    %v973 = vmul.f32 %v966, %v966
    %v974 = vmul.f32 %v969, %v969
    %v975 = vadd.f32 %v937, %v973
    %v976 = vadd.f32 %v938, %v974
    %s977 = scalar_lea.vmem [#allocation4], 384
    %v978 = vld [vmem:[%s977] sm:$0xff]
    %v979 = vld [vmem:[%s977 + $0x8] sm:$0xff]
    %v981 = vsel %vm63, %v978, 0
    %v984 = vsel %vm63, %v979, 0
    %986 = vmatpush.msra.mxu0 0.0
    %987 = vmatpush.msra.mxu0 0.0
    %988 = vmatpush.msra.mxu0 0.0
    %989 = vmatpush.msra.mxu0 0.0
    %990 = vmatpush.msra.mxu0 0.0
    %991 = vmatpush.msra.mxu0 %v72
    %992 = vmatpush.msra.mxu0 %v59
    %993 = vmatpush.msra.mxu0 %v58
    %994 = vmatpush.msra.mxu0 %v57
    %995 = vmatpush.msra.mxu0 %v56
    %996 = vmatpush.msra.mxu0 %v55
    %997 = vmatpush.msra.mxu0 %v54
    %998 = vmatpush.msra.mxu0 %v53
    %999 = vmatpush.msra.mxu0 %v52
    %1000 = vmatpush.msra.mxu0 %v51
    %1001 = vmatpush.msra.mxu0 %v50
    %1002 = vmatmul.f32.gmra.mxu0 %v981
    %v1003 = vpop.f32.mrf.mxu0
    %v1004 = vadd.f32 0.0, %v1003
    %1005 = vmatmul.f32.gmra.mxu0 %v984
    %v1006 = vpop.f32.mrf.mxu0
    %v1007 = vadd.f32 0.0, %v1006
    %1008 = vdwg.mxu0
    %v1009 = vadd.f32 %v971, %v1004
    %v1010 = vadd.f32 %v972, %v1007
    %v1011 = vmul.f32 %v1004, %v1004
    %v1012 = vmul.f32 %v1007, %v1007
    %v1013 = vadd.f32 %v975, %v1011
    %v1014 = vadd.f32 %v976, %v1012
    %v1015 = vld [vmem:[%s2] sm:$0xff]
    %v1016 = vld [vmem:[%s2 + $0x8] sm:$0xff]
    %1017 = vadd.xlane.f32.xlu0 %v1009
    %v1018 = vpop.xlane.xlu0 %1017
    %1019 = vadd.xlane.f32.xlu0 %v1010
    %v1020 = vpop.xlane.xlu0 %1019
    %1021 = vadd.xlane.f32.xlu0 %v1013
    %v1022 = vpop.xlane.xlu0 %1021
    %1023 = vadd.xlane.f32.xlu0 %v1014
    %v1024 = vpop.xlane.xlu0 %1023
    %vm1025 = vcmask 7168
    %v1026 = vsel %vm1025, %v1018, %v1022
    %v1027 = vsel %vm1025, %v1020, %v1024
    %v1028 = vadd.f32 %v1015, %v1026
    %v1029 = vadd.f32 %v1016, %v1027
    %vm1030 = vcmask 15360
    %1031 = vst.msk [vmem:[%s2] sm:$0xff] %vm1030, %v1028
    %1032 = vst.msk [vmem:[%s2 + $0x8] sm:$0xff] %vm1030, %v1029
    // Predicated region
    $region22: #{tpu_custom_call.1} parent=1 // pred_check
      _
    $region23: #{tpu_custom_call.1} parent=1 // pred_check_branch
      %1034 = sbr.rel (0) target = $region25
    $region24: #{tpu_custom_call.1} parent=1 // pred_region
      _
    $region25: #{tpu_custom_call.1} parent=1 // pred_fallthru
      _
    // Predicated region
    $region26: #{tpu_custom_call.1} parent=1 // pred_check
      _
    $region27: #{tpu_custom_call.1} parent=1 // pred_check_branch
      %1036 = sbr.rel (0) target = $region29
    $region28: #{tpu_custom_call.1} parent=1 // pred_region
      _
    $region29: #{tpu_custom_call.1} parent=1 // pred_fallthru
      _
    %1037 = vsyncpa [#allocation3], 1
    %1038 = vsyncpa [#allocation5], 1

</llo_original>
